<compile_context>
chip_gen: v7x
topology: tpu7x:2x2x1
jax: 0.10.0
libtpu: 0.0.40
codegen_flags: <defaults>
</compile_context>

<pallas_src>
import functools
import math

import jax
import jax.numpy as jnp
from jax import lax
from jax.experimental import pallas as pl
from jax.experimental.pallas import tpu as pltpu


_LANE = 128
_SUBLANE = 8
# Conservative VMEM budget: fits v7x's 64 MiB physical VMEM (v5e/v6e have 128 MiB).
_VMEM_BUDGET_BYTES = 48 * 1024 * 1024


def _round_up(x: int, m: int) -> int:
    return ((x + m - 1) // m) * m


def _mlp_kernel(x_ref, w1_ref, b1_ref, w2_ref, b2_ref, o_ref, *,
                softmax: bool, valid_rows: int):
    """One batch tile of: tanh(x @ W1^T + b1) @ W2^T + b2 [-> softmax over dim 0]."""
    x = x_ref[...]
    # Contract on the `in` axis of both operands (x:[TB,IN], W1:[HID_P,IN]) —
    # equivalent to x @ W1^T without any wrapper-side transpose of the weights.
    h = lax.dot_general(
        x, w1_ref[...],
        dimension_numbers=(((1,), (1,)), ((), ())),
        preferred_element_type=jnp.float32)
    h = jnp.tanh(h + b1_ref[...])                      # f32 epilogue (v5e-safe)

    y = lax.dot_general(
        h.astype(w2_ref.dtype), w2_ref[...],
        dimension_numbers=(((1,), (1,)), ((), ())),
        preferred_element_type=jnp.float32)
    y = y + b2_ref[...]

    if softmax:
        # torch.softmax(x, 0): softmax over the batch (sublane) axis.  Only
        # valid because the whole batch lives in this single invocation.
        if valid_rows < y.shape[0]:
            # Mask sublane-padding rows out of the max / denominator.
            row = lax.broadcasted_iota(jnp.int32, y.shape, 0)
            y = jnp.where(row < valid_rows, y, jnp.finfo(jnp.float32).min)
        y = y - jnp.max(y, axis=0, keepdims=True)
        e = jnp.exp(y)
        y = e * pl.reciprocal(jnp.sum(e, axis=0, keepdims=True), approx=True)

    o_ref[...] = y.astype(o_ref.dtype)


def _vmem_bytes(tb, in_sz, hid_p, out_p, act_isize, w_isize):
    x_tile = tb * in_sz * act_isize
    o_tile = tb * out_p * 4
    weights = (hid_p * in_sz + out_p * hid_p) * w_isize
    biases = (hid_p + out_p) * 4
    h_live = tb * hid_p * 4
    # BlockSpec double-buffers every operand.
    return 2 * (x_tile + o_tile + weights + biases) + h_live


def _pick_batch_tile(block_b, b_pad8, in_sz, hid_p, out_p, isize):
    for tb in (1024, 512, 256, 128, 64, 32, 16, 8):
        if tb > max(block_b, _SUBLANE):
            continue
        tb_eff = min(tb, b_pad8)
        if _vmem_bytes(tb_eff, in_sz, hid_p, out_p, isize, isize) <= _VMEM_BUDGET_BYTES:
            return tb_eff
    return min(_SUBLANE, b_pad8)


def nn_forward(x, w1, b1, w2, b2, *, softmax: bool = False,
               block_b: int = 512, mxu_dtype=jnp.float32):
    """Forward pass of NN(inSize, outSize, layers=[hidden]).

    x : [B, inSize]         (f32)
    w1: [hidden, inSize]    b1: [hidden]      (PyTorch nn.Linear layout)
    w2: [outSize, hidden]   b2: [outSize]
    """
    B, IN = x.shape
    HID = w1.shape[0]
    OUT = w2.shape[0]

    hid_p = _round_up(HID, _LANE)
    out_p = _round_up(OUT, _LANE)

    # Lane-dense zero padding of the feature dims.  Padded hidden units get
    # zero weights/bias -> tanh(0)=0 -> contribute nothing; padded output
    # columns are sliced off below.  (In a training loop, hoist these pads and
    # casts outside the jitted step so they run once, not once per call.)
    w1p = jnp.pad(w1, ((0, hid_p - HID), (0, 0))).astype(mxu_dtype)
    w2p = jnp.pad(w2, ((0, out_p - OUT), (0, hid_p - HID))).astype(mxu_dtype)
    b1p = jnp.pad(b1, (0, hid_p - HID)).reshape(1, hid_p).astype(jnp.float32)
    b2p = jnp.pad(b2, (0, out_p - OUT)).reshape(1, out_p).astype(jnp.float32)
    xk = x.astype(mxu_dtype)

    isize = jnp.dtype(mxu_dtype).itemsize
    b_pad8 = _round_up(B, _SUBLANE)

    if softmax:
        # dim-0 softmax couples every row: keep the whole batch in ONE kernel
        # invocation.  Tiling B here would be numerically incorrect.
        # TODO(synk): two-pass (cross-tile max/sum) scheme for batches too
        # large to fit one VMEM tile when softmax=True.
        tb = b_pad8
    else:
        tb = _pick_batch_tile(block_b, b_pad8, IN, hid_p, out_p, isize)

    b_pad = _round_up(B, tb)
    if b_pad != B:
        xk = jnp.pad(xk, ((0, b_pad - B), (0, 0)))

    grid = (b_pad // tb,)
    kernel = functools.partial(_mlp_kernel, softmax=softmax,
                               valid_rows=(B if softmax else tb))

    out_padded = pl.pallas_call(
        kernel,
        out_shape=jax.ShapeDtypeStruct((b_pad, out_p), jnp.float32),
        grid=grid,
        in_specs=[
            pl.BlockSpec((tb, IN), lambda i: (i, 0)),        # x: streams over B
            pl.BlockSpec((hid_p, IN), lambda i: (0, 0)),     # W1: VMEM-resident
            pl.BlockSpec((1, hid_p), lambda i: (0, 0)),      # b1: VMEM-resident
            pl.BlockSpec((out_p, hid_p), lambda i: (0, 0)),  # W2: VMEM-resident
            pl.BlockSpec((1, out_p), lambda i: (0, 0)),      # b2: VMEM-resident
        ],
        out_specs=pl.BlockSpec((tb, out_p), lambda i: (i, 0)),
        compiler_params=pltpu.CompilerParams(
            # "parallel" lets v7x's 2 TensorCores split the batch grid; the
            # softmax path (single block over the whole batch) is "arbitrary".
            dimension_semantics=(("arbitrary",) if softmax else ("parallel",)),
            vmem_limit_bytes=_VMEM_BUDGET_BYTES,
        ),
    )(xk, w1p, b1p, w2p, b2p)

    return out_padded[:B, :OUT]


def _init_linear(key, in_features, out_features):
    """Deterministic init mimicking torch.nn.Linear default (U[-1/sqrt(in), 1/sqrt(in)])."""
    kw, kb = jax.random.split(key)
    bound = 1.0 / math.sqrt(in_features)
    w = jax.random.uniform(kw, (out_features, in_features), jnp.float32, -bound, bound)
    b = jax.random.uniform(kb, (out_features,), jnp.float32, -bound, bound)
    return w, b


if __name__ == "__main__":
    # Shapes consistent with the module: NN(inSize=32, outSize=8, layers=[32])
    B, IN, HID, OUT = 8, 32, 32, 8

    key = jax.random.PRNGKey(0)
    kx, k1, k2, kx2 = jax.random.split(key, 4)
    x = jax.random.normal(kx, (B, IN), jnp.float32)
    w1, b1 = _init_linear(k1, IN, HID)     # nn.Linear(inSize, hidden)
    w2, b2 = _init_linear(k2, HID, OUT)    # nn.Linear(hidden, outSize)

    ref = jnp.tanh(x @ w1.T + b1) @ w2.T + b2

    # 1) default forward (softmax=False), f32 MXU path.
    out = jax.block_until_ready(nn_forward(x, w1, b1, w2, b2))
    assert out.shape == (B, OUT)
    assert jnp.allclose(out, ref, atol=1e-4, rtol=1e-4)

    # 2) softmax=True path (dim-0 softmax, whole batch in one invocation).
    out_sm = jax.block_until_ready(nn_forward(x, w1, b1, w2, b2, softmax=True))
    assert jnp.allclose(out_sm, jax.nn.softmax(ref, axis=0), atol=2e-3, rtol=2e-3)

    # 3) softmax with a batch needing sublane padding (exercises row masking).
    x5 = jax.random.normal(kx2, (5, IN), jnp.float32)
    ref5 = jnp.tanh(x5 @ w1.T + b1) @ w2.T + b2
    out5 = jax.block_until_ready(nn_forward(x5, w1, b1, w2, b2, softmax=True))
    assert out5.shape == (5, OUT)
    assert jnp.allclose(out5, jax.nn.softmax(ref5, axis=0), atol=2e-3, rtol=2e-3)

    # 4) bf16 MXU-operand path (recommended for v6e/v7x), f32 accumulate/epilogue.
    out_bf = jax.block_until_ready(
        nn_forward(x, w1, b1, w2, b2, mxu_dtype=jnp.bfloat16))
    assert jnp.allclose(out_bf, ref, atol=5e-2, rtol=5e-2)

    print("KERNEL_OK")
</pallas_src>

<mosaic_0001>
module attributes {stable_mosaic.version = 11 : i64} {
  func.func @_mlp_kernel(%arg0: i32, %arg1: memref<8x32xf32, #tpu.memory_space<vmem>>, %arg2: memref<128x32xf32, #tpu.memory_space<vmem>>, %arg3: memref<1x128xf32, #tpu.memory_space<vmem>>, %arg4: memref<128x128xf32, #tpu.memory_space<vmem>>, %arg5: memref<1x128xf32, #tpu.memory_space<vmem>>, %arg6: memref<8x128xf32, #tpu.memory_space<vmem>>) attributes {dimension_semantics = [#tpu.dimension_semantics<parallel>], iteration_bounds = array<i64: 1>, scalar_prefetch = 0 : i64, scratch_operands = 0 : i64, tpu.core_type = #tpu.core_type<tc>, window_params = [{transform_indices = @transform_0, window_bounds = array<i64: 8, 32>}, {pipeline_mode = #tpu.pipeline_mode<synchronous>, transform_indices = @transform_1, window_bounds = array<i64: 128, 32>}, {pipeline_mode = #tpu.pipeline_mode<synchronous>, transform_indices = @transform_2, window_bounds = array<i64: 1, 128>}, {pipeline_mode = #tpu.pipeline_mode<synchronous>, transform_indices = @transform_3, window_bounds = array<i64: 128, 128>}, {pipeline_mode = #tpu.pipeline_mode<synchronous>, transform_indices = @transform_4, window_bounds = array<i64: 1, 128>}, {transform_indices = @transform_5, window_bounds = array<i64: 8, 128>}]} {
    %c0 = arith.constant 0 : index
    %c0_0 = arith.constant 0 : index
    %0 = vector.load %arg1[%c0, %c0_0] : memref<8x32xf32, #tpu.memory_space<vmem>>, vector<8x32xf32>
    %c0_1 = arith.constant 0 : index
    %c0_2 = arith.constant 0 : index
    %1 = vector.load %arg2[%c0_1, %c0_2] : memref<128x32xf32, #tpu.memory_space<vmem>>, vector<128x32xf32>
    %cst = arith.constant dense<0.000000e+00> : vector<8x128xf32>
    %2 = tpu.matmul %0, %1, %cst {dimension_numbers = #tpu.dot_dimension_numbers<[1], [1], [0], [0], [0, 0, 1, 0], [], []>} : vector<8x32xf32>, vector<128x32xf32>, vector<8x128xf32> -> vector<8x128xf32>
    %c0_3 = arith.constant 0 : index
    %c0_4 = arith.constant 0 : index
    %3 = vector.load %arg3[%c0_3, %c0_4] : memref<1x128xf32, #tpu.memory_space<vmem>>, vector<1x128xf32>
    %4 = vector.broadcast %3 : vector<1x128xf32> to vector<8x128xf32>
    %5 = arith.addf %2, %4 : vector<8x128xf32>
    %6 = math.tanh %5 : vector<8x128xf32>
    %c0_5 = arith.constant 0 : index
    %c0_6 = arith.constant 0 : index
    %7 = vector.load %arg4[%c0_5, %c0_6] : memref<128x128xf32, #tpu.memory_space<vmem>>, vector<128x128xf32>
    %cst_7 = arith.constant dense<0.000000e+00> : vector<8x128xf32>
    %8 = tpu.matmul %6, %7, %cst_7 {dimension_numbers = #tpu.dot_dimension_numbers<[1], [1], [0], [0], [0, 0, 1, 0], [], []>} : vector<8x128xf32>, vector<128x128xf32>, vector<8x128xf32> -> vector<8x128xf32>
    %c0_8 = arith.constant 0 : index
    %c0_9 = arith.constant 0 : index
    %9 = vector.load %arg5[%c0_8, %c0_9] : memref<1x128xf32, #tpu.memory_space<vmem>>, vector<1x128xf32>
    %10 = vector.broadcast %9 : vector<1x128xf32> to vector<8x128xf32>
    %11 = arith.addf %8, %10 : vector<8x128xf32>
    %c0_10 = arith.constant 0 : index
    %c0_11 = arith.constant 0 : index
    %12 = vector.load %arg6[%c0_10, %c0_11] : memref<8x128xf32, #tpu.memory_space<vmem>>, vector<8x128xf32>
    tpu.vector_store %arg6[%c0_10, %c0_11], %11 {strides = array<i32>} : memref<8x128xf32, #tpu.memory_space<vmem>>, vector<8x128xf32>,
    return
  }
  func.func @transform_0(%arg0: i32) -> (i32, i32) {
    %c0_i32 = arith.constant 0 : i32
    %c0_i32_0 = arith.constant 0 : i32
    return %arg0, %c0_i32 : i32, i32
  }
  func.func @transform_1(%arg0: i32) -> (i32, i32) {
    %c0_i32 = arith.constant 0 : i32
    %c0_i32_0 = arith.constant 0 : i32
    %c0_i32_1 = arith.constant 0 : i32
    return %c0_i32, %c0_i32_0 : i32, i32
  }
  func.func @transform_2(%arg0: i32) -> (i32, i32) {
    %c0_i32 = arith.constant 0 : i32
    %c0_i32_0 = arith.constant 0 : i32
    %c0_i32_1 = arith.constant 0 : i32
    return %c0_i32, %c0_i32_0 : i32, i32
  }
  func.func @transform_3(%arg0: i32) -> (i32, i32) {
    %c0_i32 = arith.constant 0 : i32
    %c0_i32_0 = arith.constant 0 : i32
    %c0_i32_1 = arith.constant 0 : i32
    return %c0_i32, %c0_i32_0 : i32, i32
  }
  func.func @transform_4(%arg0: i32) -> (i32, i32) {
    %c0_i32 = arith.constant 0 : i32
    %c0_i32_0 = arith.constant 0 : i32
    %c0_i32_1 = arith.constant 0 : i32
    return %c0_i32, %c0_i32_0 : i32, i32
  }
  func.func @transform_5(%arg0: i32) -> (i32, i32) {
    %c0_i32 = arith.constant 0 : i32
    %c0_i32_0 = arith.constant 0 : i32
    return %arg0, %c0_i32 : i32, i32
  }
}

</mosaic_0001>

<llo_original>
// kernel: tpu_custom_call.1
$region0: #{tpu_custom_call.1}
  #allocation0 [shape = 'u32[]', space=smem, size = 0x4, offset = 0x4, fixed_abs, tag = 'smem constant byte address 0x4 - core index']
  #allocation1 [shape = 'u32[144,128]{1,0:T(1,128)}', space=vmem, size = 0x12000, scoped, tag = 'internal scratch']
  %s0 = inlined_call_operand.vmem [shape: f32[8,32], index: 0, kind: input, shape index: {}]
  %s1 = inlined_call_operand.vmem [shape: f32[128,32], index: 1, kind: input, shape index: {}]
  %s2 = inlined_call_operand.vmem [shape: f32[1,128], index: 2, kind: input, shape index: {}]
  %s3 = inlined_call_operand.vmem [shape: f32[128,128], index: 3, kind: input, shape index: {}]
  %s4 = inlined_call_operand.vmem [shape: f32[1,128], index: 4, kind: input, shape index: {}]
  %s5 = inlined_call_operand.hbm [shape: f32[8,128], index: 5, kind: output, shape index: {}]
  %s6 = sld [smem:[#allocation0]]
  $region30: #{tpu_custom_call.1} parent=0
    _
  %s8 = ssub.s32 1, %s6
  %s9 = scalar_select 0, %s8, %s6
  $region1: #{tpu_custom_call.1} parent=0
    #allocation2 [shape = 'u8[4096]{0}', space=vmem, size = 0x1000, scoped, tag = 'output window, operand 0, single buffered']
    #allocation3 [shape = 's32[1]{0}', space=sflag, size = 0x4, scoped, tag = 'scoped memory for tpu_custom_call.1']
    %10 = vsyncpa [#allocation3], 0
    // Predicated region
    $region2: #{tpu_custom_call.1} parent=1 // pred_check
      _
    $region3: #{tpu_custom_call.1} parent=1 // pred_check_branch
      %12 = sbr.rel (0) target = $region5
    $region4: #{tpu_custom_call.1} parent=1 // pred_region
      _
    $region5: #{tpu_custom_call.1} parent=1 // pred_fallthru
      _
    // Predicated region
    $region6: #{tpu_custom_call.1} parent=1 // pred_check
      _
    $region7: #{tpu_custom_call.1} parent=1 // pred_check_branch
      %14 = sbr.rel (0) target = $region9
    $region8: #{tpu_custom_call.1} parent=1 // pred_region
      _
    $region9: #{tpu_custom_call.1} parent=1 // pred_fallthru
      _
    // Predicated region
    $region10: #{tpu_custom_call.1} parent=1 // pred_check
      _
    $region11: #{tpu_custom_call.1} parent=1 // pred_check_branch
      %16 = sbr.rel (0) target = $region13
    $region12: #{tpu_custom_call.1} parent=1 // pred_region
      _
    $region13: #{tpu_custom_call.1} parent=1 // pred_fallthru
      _
    // Predicated region
    $region14: #{tpu_custom_call.1} parent=1 // pred_check
      _
    $region15: #{tpu_custom_call.1} parent=1 // pred_check_branch
      %18 = sbr.rel (0) target = $region17
    $region16: #{tpu_custom_call.1} parent=1 // pred_region
      _
    $region17: #{tpu_custom_call.1} parent=1 // pred_fallthru
      _
    // Predicated region
    $region18: #{tpu_custom_call.1} parent=1 // pred_check
      _
    $region19: #{tpu_custom_call.1} parent=1 // pred_check_branch
      %20 = sbr.rel (0) target = $region21
    $region20: #{tpu_custom_call.1} parent=1 // pred_region
      _
    $region21: #{tpu_custom_call.1} parent=1 // pred_fallthru
      _
    %v21 = vld [vmem:[%s0] sm:$0xff]
    %v22 = vld [vmem:[%s1] sm:$0xff]
    %v23 = vld [vmem:[%s1 + $0x8] sm:$0xff]
    %v24 = vld [vmem:[%s1 + $0x10] sm:$0xff]
    %v25 = vld [vmem:[%s1 + $0x18] sm:$0xff]
    %v26 = vld [vmem:[%s1 + $0x20] sm:$0xff]
    %v27 = vld [vmem:[%s1 + $0x28] sm:$0xff]
    %v28 = vld [vmem:[%s1 + $0x30] sm:$0xff]
    %v29 = vld [vmem:[%s1 + $0x38] sm:$0xff]
    %v30 = vld [vmem:[%s1 + $0x40] sm:$0xff]
    %v31 = vld [vmem:[%s1 + $0x48] sm:$0xff]
    %v32 = vld [vmem:[%s1 + $0x50] sm:$0xff]
    %v33 = vld [vmem:[%s1 + $0x58] sm:$0xff]
    %v34 = vld [vmem:[%s1 + $0x60] sm:$0xff]
    %v35 = vld [vmem:[%s1 + $0x68] sm:$0xff]
    %v36 = vld [vmem:[%s1 + $0x70] sm:$0xff]
    %v37 = vld [vmem:[%s1 + $0x78] sm:$0xff]
    %v38 = vld [vmem:[%s2] sm:$0x1]
    %v40 = vlaneseq
    %v41 = vshrl.u32 %v40, 7
    %v42 = vsub.s32 0, %v41
    %v43 = vrot.slane %v38, %v42
    %vm45 = vcmask 261120
    %v47 = vsel %vm45, %v21, 0
    %v50 = vsel %vm45, %v22, 0
    %v53 = vsel %vm45, %v23, 0
    %v56 = vsel %vm45, %v24, 0
    %v59 = vsel %vm45, %v25, 0
    %v62 = vsel %vm45, %v26, 0
    %v65 = vsel %vm45, %v27, 0
    %v68 = vsel %vm45, %v28, 0
    %v71 = vsel %vm45, %v29, 0
    %v74 = vsel %vm45, %v30, 0
    %v77 = vsel %vm45, %v31, 0
    %v80 = vsel %vm45, %v32, 0
    %v83 = vsel %vm45, %v33, 0
    %v86 = vsel %vm45, %v34, 0
    %v89 = vsel %vm45, %v35, 0
    %v92 = vsel %vm45, %v36, 0
    %v95 = vsel %vm45, %v37, 0
    %97 = vmatprep.subr.mxu0 0.0
    %98 = vmatpush1.xpose.msra.mxu0 %v50
    %99 = vmatprep.subr.mxu0 0.0
    %100 = vmatpush1.xpose.msra.mxu0 %v53
    %101 = vmatprep.subr.mxu0 0.0
    %102 = vmatpush1.xpose.msra.mxu0 %v56
    %103 = vmatprep.subr.mxu0 0.0
    %104 = vmatpush1.xpose.msra.mxu0 %v59
    %105 = vmatprep.subr.mxu0 0.0
    %106 = vmatpush1.xpose.msra.mxu0 %v62
    %107 = vmatprep.subr.mxu0 0.0
    %108 = vmatpush1.xpose.msra.mxu0 %v65
    %109 = vmatprep.subr.mxu0 0.0
    %110 = vmatpush1.xpose.msra.mxu0 %v68
    %111 = vmatprep.subr.mxu0 0.0
    %112 = vmatpush1.xpose.msra.mxu0 %v71
    %113 = vmatprep.subr.mxu0 0.0
    %114 = vmatpush1.xpose.msra.mxu0 %v74
    %115 = vmatprep.subr.mxu0 0.0
    %116 = vmatpush1.xpose.msra.mxu0 %v77
    %117 = vmatprep.subr.mxu0 0.0
    %118 = vmatpush1.xpose.msra.mxu0 %v80
    %119 = vmatprep.subr.mxu0 0.0
    %120 = vmatpush1.xpose.msra.mxu0 %v83
    %121 = vmatprep.subr.mxu0 0.0
    %122 = vmatpush1.xpose.msra.mxu0 %v86
    %123 = vmatprep.subr.mxu0 0.0
    %124 = vmatpush1.xpose.msra.mxu0 %v89
    %125 = vmatprep.subr.mxu0 0.0
    %126 = vmatpush1.xpose.msra.mxu0 %v92
    %127 = vmatprep.subr.mxu0 0.0
    %128 = vmatpush1.xpose.msra.mxu0 %v95
    %129 = vmatprep.subr.mxu0 0.0
    %130 = vmatpush1.xpose.msra.mxu0 0.0
    %131 = vmatprep.subr.mxu0 0.0
    %132 = vmatpush1.xpose.msra.mxu0 0.0
    %133 = vmatprep.subr.mxu0 0.0
    %134 = vmatpush1.xpose.msra.mxu0 0.0
    %135 = vmatprep.subr.mxu0 0.0
    %136 = vmatpush1.xpose.msra.mxu0 0.0
    %137 = vmatprep.subr.mxu0 0.0
    %138 = vmatpush1.xpose.msra.mxu0 0.0
    %139 = vmatprep.subr.mxu0 0.0
    %140 = vmatpush1.xpose.msra.mxu0 0.0
    %141 = vmatprep.subr.mxu0 0.0
    %142 = vmatpush1.xpose.msra.mxu0 0.0
    %143 = vmatprep.subr.mxu0 0.0
    %144 = vmatpush1.xpose.msra.mxu0 0.0
    %145 = vmatprep.subr.mxu0 0.0
    %146 = vmatpush1.xpose.msra.mxu0 0.0
    %147 = vmatprep.subr.mxu0 0.0
    %148 = vmatpush1.xpose.msra.mxu0 0.0
    %149 = vmatprep.subr.mxu0 0.0
    %150 = vmatpush1.xpose.msra.mxu0 0.0
    %151 = vmatprep.subr.mxu0 0.0
    %152 = vmatpush1.xpose.msra.mxu0 0.0
    %153 = vmatprep.subr.mxu0 0.0
    %154 = vmatpush1.xpose.msra.mxu0 0.0
    %155 = vmatprep.subr.mxu0 0.0
    %156 = vmatpush1.xpose.msra.mxu0 0.0
    %157 = vmatprep.subr.mxu0 0.0
    %158 = vmatpush1.xpose.msra.mxu0 0.0
    %159 = vmatprep.subr.mxu0 0.0
    %160 = vmatpush1.xpose.msra.mxu0 0.0
    %161 = vmatprep.mubr.f32.mxu0 0.0
    %162 = vmatmul.mubr.f32.gmra.mrb[0].mxu0 %v47
    %v163 = vpop.f32.mrb[0].mxu0
    %v164 = vadd.f32 %v43, %v163
    %v165 = vpop.f32.mrb[0].mxu0
    %166 = vdwg.mxu0
    %v167 = vtanh.pop %v164
    %v168 = vld [vmem:[%s3] sm:$0xff]
    %v169 = vld [vmem:[%s3 + $0x8] sm:$0xff]
    %v170 = vld [vmem:[%s3 + $0x10] sm:$0xff]
    %v171 = vld [vmem:[%s3 + $0x18] sm:$0xff]
    %v172 = vld [vmem:[%s3 + $0x20] sm:$0xff]
    %v173 = vld [vmem:[%s3 + $0x28] sm:$0xff]
    %v174 = vld [vmem:[%s3 + $0x30] sm:$0xff]
    %v175 = vld [vmem:[%s3 + $0x38] sm:$0xff]
    %v176 = vld [vmem:[%s3 + $0x40] sm:$0xff]
    %v177 = vld [vmem:[%s3 + $0x48] sm:$0xff]
    %v178 = vld [vmem:[%s3 + $0x50] sm:$0xff]
    %v179 = vld [vmem:[%s3 + $0x58] sm:$0xff]
    %v180 = vld [vmem:[%s3 + $0x60] sm:$0xff]
    %v181 = vld [vmem:[%s3 + $0x68] sm:$0xff]
    %v182 = vld [vmem:[%s3 + $0x70] sm:$0xff]
    %v183 = vld [vmem:[%s3 + $0x78] sm:$0xff]
    %v184 = vld [vmem:[%s4] sm:$0x1]
    %v186 = vlaneseq
    %v187 = vshrl.u32 %v186, 7
    %v188 = vsub.s32 0, %v187
    %v189 = vrot.slane %v184, %v188
    %191 = vmatprep.subr.mxu0 0.0
    %192 = vmatpush1.xpose.msra.mxu0 %v168
    %193 = vmatprep.subr.mxu0 0.0
    %194 = vmatpush1.xpose.msra.mxu0 %v169
    %195 = vmatprep.subr.mxu0 0.0
    %196 = vmatpush1.xpose.msra.mxu0 %v170
    %197 = vmatprep.subr.mxu0 0.0
    %198 = vmatpush1.xpose.msra.mxu0 %v171
    %199 = vmatprep.subr.mxu0 0.0
    %200 = vmatpush1.xpose.msra.mxu0 %v172
    %201 = vmatprep.subr.mxu0 0.0
    %202 = vmatpush1.xpose.msra.mxu0 %v173
    %203 = vmatprep.subr.mxu0 0.0
    %204 = vmatpush1.xpose.msra.mxu0 %v174
    %205 = vmatprep.subr.mxu0 0.0
    %206 = vmatpush1.xpose.msra.mxu0 %v175
    %207 = vmatprep.subr.mxu0 0.0
    %208 = vmatpush1.xpose.msra.mxu0 %v176
    %209 = vmatprep.subr.mxu0 0.0
    %210 = vmatpush1.xpose.msra.mxu0 %v177
    %211 = vmatprep.subr.mxu0 0.0
    %212 = vmatpush1.xpose.msra.mxu0 %v178
    %213 = vmatprep.subr.mxu0 0.0
    %214 = vmatpush1.xpose.msra.mxu0 %v179
    %215 = vmatprep.subr.mxu0 0.0
    %216 = vmatpush1.xpose.msra.mxu0 %v180
    %217 = vmatprep.subr.mxu0 0.0
    %218 = vmatpush1.xpose.msra.mxu0 %v181
    %219 = vmatprep.subr.mxu0 0.0
    %220 = vmatpush1.xpose.msra.mxu0 %v182
    %221 = vmatprep.subr.mxu0 0.0
    %222 = vmatpush1.xpose.msra.mxu0 %v183
    %223 = vmatprep.subr.mxu0 0.0
    %224 = vmatpush1.xpose.msra.mxu0 0.0
    %225 = vmatprep.subr.mxu0 0.0
    %226 = vmatpush1.xpose.msra.mxu0 0.0
    %227 = vmatprep.subr.mxu0 0.0
    %228 = vmatpush1.xpose.msra.mxu0 0.0
    %229 = vmatprep.subr.mxu0 0.0
    %230 = vmatpush1.xpose.msra.mxu0 0.0
    %231 = vmatprep.subr.mxu0 0.0
    %232 = vmatpush1.xpose.msra.mxu0 0.0
    %233 = vmatprep.subr.mxu0 0.0
    %234 = vmatpush1.xpose.msra.mxu0 0.0
    %235 = vmatprep.subr.mxu0 0.0
    %236 = vmatpush1.xpose.msra.mxu0 0.0
    %237 = vmatprep.subr.mxu0 0.0
    %238 = vmatpush1.xpose.msra.mxu0 0.0
    %239 = vmatprep.subr.mxu0 0.0
    %240 = vmatpush1.xpose.msra.mxu0 0.0
    %241 = vmatprep.subr.mxu0 0.0
    %242 = vmatpush1.xpose.msra.mxu0 0.0
    %243 = vmatprep.subr.mxu0 0.0
    %244 = vmatpush1.xpose.msra.mxu0 0.0
    %245 = vmatprep.subr.mxu0 0.0
    %246 = vmatpush1.xpose.msra.mxu0 0.0
    %247 = vmatprep.subr.mxu0 0.0
    %248 = vmatpush1.xpose.msra.mxu0 0.0
    %249 = vmatprep.subr.mxu0 0.0
    %250 = vmatpush1.xpose.msra.mxu0 0.0
    %251 = vmatprep.subr.mxu0 0.0
    %252 = vmatpush1.xpose.msra.mxu0 0.0
    %253 = vmatprep.subr.mxu0 0.0
    %254 = vmatpush1.xpose.msra.mxu0 0.0
    %255 = vmatprep.mubr.f32.mxu0 0.0
    %256 = vmatmul.mubr.f32.gmra.mrb[0].mxu0 %v167
    %v257 = vpop.f32.mrb[0].mxu0
    %v258 = vadd.f32 %v189, %v257
    %v259 = vpop.f32.mrb[0].mxu0
    %260 = vdwg.mxu0
    %261 = vst [vmem:[#allocation2] sm:$0xff] %v258
    // Predicated region
    $region22: #{tpu_custom_call.1} parent=1 // pred_check
      _
    $region23: #{tpu_custom_call.1} parent=1 // pred_check_branch
      %263 = sbr.rel (0) target = $region25
    $region24: #{tpu_custom_call.1} parent=1 // pred_region
      %s265 = ssub.s32 128, 128
      %266 = vsyncadd [#allocation3], %s265
      %s268 = sshll.u32 [#allocation2], 4
      %s269 = int_to_ptr.vmem [resolvable:$true] %s268
      %271 = dma.vmem_to_hbm [thread:$0]  %s269, 128, %s5, [#allocation3]
    $region25: #{tpu_custom_call.1} parent=1 // pred_fallthru
      _
    // Predicated region
    $region26: #{tpu_custom_call.1} parent=1 // pred_check
      _
    $region27: #{tpu_custom_call.1} parent=1 // pred_check_branch
      %273 = sbr.rel (0) target = $region29
    $region28: #{tpu_custom_call.1} parent=1 // pred_region
      %274 = dma.done [#allocation3], 128
    $region29: #{tpu_custom_call.1} parent=1 // pred_fallthru
      _
    %275 = vsyncpa [#allocation3], 1

</llo_original>
